<compile_context>
chip_gen: v6e
topology: v6e:2x2x1
jax: 0.10.0
libtpu: 0.0.40
codegen_flags: <defaults>
</compile_context>

<pallas_src>
import jax
import jax.numpy as jnp
import numpy as np
from jax.experimental import pallas as pl
from jax.experimental.pallas import tpu as pltpu


# ---------------------------------------------------------------------------
# Kernel
# ---------------------------------------------------------------------------
def _make_embed_kernel(drop_class: int):
    """Returns kernel: out[b,:] = table[where(drop[b], drop_class, labels[b]), :]."""

    def kernel(labels_ref, drop_ref, table_ref, out_ref):
        labels = labels_ref[...]                                  # (TB, 1) i32
        drop = drop_ref[...]                                      # (TB, 1) i32
        # Fused token_drop.
        labels = jnp.where(drop != 0, drop_class, labels)         # (TB, 1) i32
        tb = labels.shape[0]
        v = table_ref.shape[0]
        class_ids = jax.lax.broadcasted_iota(jnp.int32, (tb, v), 1)  # (TB, V)
        onehot = (labels == class_ids).astype(table_ref.dtype)       # (TB, V)
        out_ref[...] = jnp.dot(
            onehot, table_ref[...], preferred_element_type=jnp.float32
        ).astype(out_ref.dtype)

    return kernel


# ---------------------------------------------------------------------------
# Tiling policy
# ---------------------------------------------------------------------------
_MIN_SPLIT_B = 1024  # only force >= 2 grid steps above this batch size


def _choose_tile_b(B: int, block_b: int) -> int:
    """Pick the batch tile: multiple of 8 (sublane-dense stores), as large as
    block_b, but with >= 2 grid steps for big batches (v7x 2-TC split)."""
    if B <= 8 or (B % 8 != 0 and B <= block_b):
        # One block == full batch.  (block dim equal to the full array dim is
        # always a legal tiling, even when not a multiple of 8.)
        return B
    TB = max(8, min(block_b, (B // 8) * 8))
    if B >= _MIN_SPLIT_B:
        # Keep >= 2 grid steps so both v7x TensorCores get work and output
        # DMA overlaps compute.  Irrelevant (harmful) for small batches where
        # per-step overhead dominates, hence the threshold.
        while pl.cdiv(B, TB) < 2 and TB > 8:
            TB = max(8, ((TB // 2) // 8) * 8)
    return TB


# ---------------------------------------------------------------------------
# Wrapper
# ---------------------------------------------------------------------------
def label_embed(labels, table, drop_ids=None, *, drop_class, block_b=2048):
    """out[i, :] = table[where(drop_ids[i], drop_class, labels[i]), :].

    Whole table resident in VMEM; batch tiled in TB-row slabs; ragged last
    block handled by Pallas (no pad + slice)."""
    labels = labels.astype(jnp.int32)
    B = labels.shape[0]
    V, H = table.shape

    if drop_ids is None:
        drop_ids = jnp.zeros((B,), jnp.int32)   # no-op drop, still fused
    drop_ids = drop_ids.astype(jnp.int32)

    TB = _choose_tile_b(B, block_b)
    grid = (pl.cdiv(B, TB),)

    labels_2d = labels.reshape(B, 1)
    drop_2d = drop_ids.reshape(B, 1)

    return pl.pallas_call(
        _make_embed_kernel(int(drop_class)),
        out_shape=jax.ShapeDtypeStruct((B, H), table.dtype),
        grid=grid,
        in_specs=[
            # Per-step slab of labels / drop mask.
            pl.BlockSpec((TB, 1), lambda i: (i, 0)),
            pl.BlockSpec((TB, 1), lambda i: (i, 0)),
            # Full embedding table, same block every step -> stays in VMEM.
            pl.BlockSpec((V, H), lambda i: (0, 0)),
        ],
        out_specs=pl.BlockSpec((TB, H), lambda i: (i, 0)),
        compiler_params=pltpu.CompilerParams(
            # Batch rows are independent -> v7x can shard across its 2 TCs.
            dimension_semantics=("parallel",),
        ),
    )(labels_2d, drop_2d, table)


# ---------------------------------------------------------------------------
# Module port
# ---------------------------------------------------------------------------
class LabelEmbedder:
    """JAX/Pallas port of the PyTorch LabelEmbedder forward pass."""

    def __init__(self, num_classes, hidden_size, dropout_prob, key):
        use_cfg_embedding = int(dropout_prob > 0)
        self.num_classes = num_classes
        self.dropout_prob = dropout_prob
        # nn.Embedding default init is N(0, 1).
        self.embedding_table = jax.random.normal(
            key, (num_classes + use_cfg_embedding, hidden_size),
            dtype=jnp.float32)

    def _drop_ids(self, labels, force_drop_ids, key):
        """Compute the (B,) int32 drop mask; the `where` itself is fused
        into the Pallas kernel."""
        if force_drop_ids is not None:
            return (force_drop_ids == 1).astype(jnp.int32)
        if key is None:
            raise ValueError(
                "LabelEmbedder.forward: train=True with dropout_prob > 0 and "
                "no force_drop_ids requires a PRNG `key`.")
        return (jax.random.uniform(key, (labels.shape[0],))
                < self.dropout_prob).astype(jnp.int32)

    def forward(self, labels, train, force_drop_ids=None, key=None):
        use_dropout = self.dropout_prob > 0
        drop_ids = None
        if (train and use_dropout) or (force_drop_ids is not None):
            drop_ids = self._drop_ids(labels, force_drop_ids, key)
        return label_embed(labels, self.embedding_table, drop_ids,
                           drop_class=self.num_classes)


# ---------------------------------------------------------------------------
# Self-test
# ---------------------------------------------------------------------------
if __name__ == "__main__":
    root = jax.random.PRNGKey(0)
    k_table, k_labels, k_drop = jax.random.split(root, 3)

    num_classes = 16
    hidden_size = 128   # lane-aligned hidden dim
    dropout_prob = 0.1
    batch = 8

    embedder = LabelEmbedder(num_classes, hidden_size, dropout_prob, k_table)
    table = embedder.embedding_table

    labels = jax.random.randint(k_labels, (batch,), 0, num_classes,
                                dtype=jnp.int32)

    # 1) Deterministic CFG drop path (force_drop_ids), single small block.
    force_drop_ids = jnp.array([0, 1, 0, 0, 1, 0, 0, 0], dtype=jnp.int32)
    out = embedder.forward(labels, train=True, force_drop_ids=force_drop_ids)
    out = jax.block_until_ready(out)
    dropped = jnp.where(force_drop_ids == 1, num_classes, labels)
    ref = jnp.take(table, dropped, axis=0)
    np.testing.assert_allclose(np.asarray(out), np.asarray(ref),
                               rtol=1e-6, atol=1e-6)
    assert out.shape == (batch, hidden_size)

    # 2) Random label-dropout training path (drop mask fused in-kernel).
    out2 = embedder.forward(labels, train=True, key=k_drop)
    out2 = jax.block_until_ready(out2)
    drop2 = jax.random.uniform(k_drop, (batch,)) < dropout_prob
    ref2 = jnp.take(table, jnp.where(drop2, num_classes, labels), axis=0)
    np.testing.assert_allclose(np.asarray(out2), np.asarray(ref2),
                               rtol=1e-6, atol=1e-6)

    # 3) Eval path with a multi-step grid and a ragged last block
    #    (no pad + slice): B=40, TB=16 -> grid=(3,), last block clipped.
    batch3 = 40
    labels3 = jax.random.randint(jax.random.PRNGKey(7), (batch3,), 0,
                                 num_classes, dtype=jnp.int32)
    out3 = label_embed(labels3, table, None,
                       drop_class=num_classes, block_b=16)
    out3 = jax.block_until_ready(out3)
    ref3 = jnp.take(table, labels3, axis=0)
    np.testing.assert_allclose(np.asarray(out3), np.asarray(ref3),
                               rtol=1e-6, atol=1e-6)

    print("KERNEL_OK")
</pallas_src>

<mosaic_0001>
module attributes {stable_mosaic.version = 11 : i64} {
  func.func @kernel(%arg0: i32, %arg1: memref<8x1xi32, #tpu.memory_space<vmem>>, %arg2: memref<8x1xi32, #tpu.memory_space<vmem>>, %arg3: memref<17x128xf32, #tpu.memory_space<vmem>>, %arg4: memref<8x128xf32, #tpu.memory_space<vmem>>) attributes {dimension_semantics = [#tpu.dimension_semantics<parallel>], iteration_bounds = array<i64: 1>, scalar_prefetch = 0 : i64, scratch_operands = 0 : i64, tpu.core_type = #tpu.core_type<tc>, window_params = [{transform_indices = @transform_0, window_bounds = array<i64: 8, 1>}, {transform_indices = @transform_1, window_bounds = array<i64: 8, 1>}, {pipeline_mode = #tpu.pipeline_mode<synchronous>, transform_indices = @transform_2, window_bounds = array<i64: 17, 128>}, {transform_indices = @transform_3, window_bounds = array<i64: 8, 128>}]} {
    %c0 = arith.constant 0 : index
    %c0_0 = arith.constant 0 : index
    %0 = vector.load %arg1[%c0, %c0_0] : memref<8x1xi32, #tpu.memory_space<vmem>>, vector<8x1xi32>
    %c0_1 = arith.constant 0 : index
    %c0_2 = arith.constant 0 : index
    %1 = vector.load %arg2[%c0_1, %c0_2] : memref<8x1xi32, #tpu.memory_space<vmem>>, vector<8x1xi32>
    %c0_i32 = arith.constant 0 : i32
    %2 = vector.broadcast %c0_i32 : i32 to vector<8x1xi32>
    %3 = arith.cmpi ne, %1, %2 : vector<8x1xi32>
    %c16_i32 = arith.constant 16 : i32
    %4 = vector.broadcast %c16_i32 : i32 to vector<8x1xi32>
    %5 = arith.select %3, %4, %0 : vector<8x1xi1>, vector<8x1xi32>
    %6 = tpu.iota {dimensions = array<i32: 1>} : vector<8x17xi32>
    %7 = vector.broadcast %5 : vector<8x1xi32> to vector<8x17xi32>
    %8 = arith.cmpi eq, %7, %6 : vector<8x17xi32>
    %9 = arith.extui %8 : vector<8x17xi1> to vector<8x17xi32>
    %10 = arith.sitofp %9 : vector<8x17xi32> to vector<8x17xf32>
    %c0_3 = arith.constant 0 : index
    %c0_4 = arith.constant 0 : index
    %11 = vector.load %arg3[%c0_3, %c0_4] : memref<17x128xf32, #tpu.memory_space<vmem>>, vector<17x128xf32>
    %cst = arith.constant dense<0.000000e+00> : vector<8x128xf32>
    %12 = tpu.matmul %10, %11, %cst {dimension_numbers = #tpu.dot_dimension_numbers<[1], [0], [0], [1], [0, 0, 1, 1], [], []>} : vector<8x17xf32>, vector<17x128xf32>, vector<8x128xf32> -> vector<8x128xf32>
    %c0_5 = arith.constant 0 : index
    %c0_6 = arith.constant 0 : index
    %13 = vector.load %arg4[%c0_5, %c0_6] : memref<8x128xf32, #tpu.memory_space<vmem>>, vector<8x128xf32>
    tpu.vector_store %arg4[%c0_5, %c0_6], %12 {strides = array<i32>} : memref<8x128xf32, #tpu.memory_space<vmem>>, vector<8x128xf32>,
    return
  }
  func.func @transform_0(%arg0: i32) -> (i32, i32) {
    %c0_i32 = arith.constant 0 : i32
    %c0_i32_0 = arith.constant 0 : i32
    return %arg0, %c0_i32 : i32, i32
  }
  func.func @transform_1(%arg0: i32) -> (i32, i32) {
    %c0_i32 = arith.constant 0 : i32
    %c0_i32_0 = arith.constant 0 : i32
    return %arg0, %c0_i32 : i32, i32
  }
  func.func @transform_2(%arg0: i32) -> (i32, i32) {
    %c0_i32 = arith.constant 0 : i32
    %c0_i32_0 = arith.constant 0 : i32
    %c0_i32_1 = arith.constant 0 : i32
    return %c0_i32, %c0_i32_0 : i32, i32
  }
  func.func @transform_3(%arg0: i32) -> (i32, i32) {
    %c0_i32 = arith.constant 0 : i32
    %c0_i32_0 = arith.constant 0 : i32
    return %arg0, %c0_i32 : i32, i32
  }
}

</mosaic_0001>

<llo_original>
// kernel: tpu_custom_call.1
$region0: #{tpu_custom_call.1}
  #allocation0 [shape = 'u32[]', space=smem, size = 0x4, offset = 0x4, fixed_abs, tag = 'smem constant byte address 0x4 - core index']
  #allocation1 [shape = 'u32[144,128]{1,0:T(1,128)}', space=vmem, size = 0x12000, scoped, tag = 'internal scratch']
  %s0 = inlined_call_operand.vmem [shape: s32[8,1], index: 0, kind: input, shape index: {}]
  %s1 = inlined_call_operand.vmem [shape: s32[8,1], index: 1, kind: input, shape index: {}]
  %s2 = inlined_call_operand.hbm [shape: f32[17,128], index: 2, kind: input, shape index: {}]
  %s3 = inlined_call_operand.hbm [shape: f32[8,128], index: 3, kind: output, shape index: {}]
  %s4 = sld [smem:[#allocation0]]
  $region26: #{tpu_custom_call.1} parent=0
    _
  %s6 = ssub.s32 1, %s4
  %s7 = scalar_select 0, %s6, %s4
  $region1: #{tpu_custom_call.1} parent=0
    #allocation2 [shape = 'u8[12288]{0}', space=vmem, size = 0x3000, scoped, tag = 'input window, operand 2, single buffered']
    #allocation3 [shape = 's32[1]{0}', space=sflag, size = 0x4, scoped, tag = 'scoped memory for tpu_custom_call.1']
    #allocation4 [shape = 's32[1]{0}', space=sflag, size = 0x4, scoped, tag = 'scoped memory for tpu_custom_call.1']
    #allocation5 [shape = 'u8[4096]{0}', space=vmem, size = 0x1000, scoped, tag = 'output window, operand 0, single buffered']
    %8 = vsyncpa [#allocation3], 0
    %9 = vsyncpa [#allocation4], 0
    // Predicated region
    $region2: #{tpu_custom_call.1} parent=1 // pred_check
      _
    $region3: #{tpu_custom_call.1} parent=1 // pred_check_branch
      %11 = sbr.rel (0) target = $region5
    $region4: #{tpu_custom_call.1} parent=1 // pred_region
      _
    $region5: #{tpu_custom_call.1} parent=1 // pred_fallthru
      _
    // Predicated region
    $region6: #{tpu_custom_call.1} parent=1 // pred_check
      _
    $region7: #{tpu_custom_call.1} parent=1 // pred_check_branch
      %13 = sbr.rel (0) target = $region9
    $region8: #{tpu_custom_call.1} parent=1 // pred_region
      _
    $region9: #{tpu_custom_call.1} parent=1 // pred_fallthru
      _
    // Predicated region
    $region10: #{tpu_custom_call.1} parent=1 // pred_check
      _
    $region11: #{tpu_custom_call.1} parent=1 // pred_check_branch
      %15 = sbr.rel (0) target = $region13
    $region12: #{tpu_custom_call.1} parent=1 // pred_region
      %s17 = ssub.s32 384, 384
      %18 = vsyncadd [#allocation3], %s17
      %s19 = sshll.u32 [#allocation2], 4
      %s20 = int_to_ptr.vmem [resolvable:$true] %s19
      %25 = dma.hbm_to_vmem [thread:$0]  %s2, 384, %s20, [#allocation3], 128, 128, 8
    $region13: #{tpu_custom_call.1} parent=1 // pred_fallthru
      _
    // Predicated region
    $region14: #{tpu_custom_call.1} parent=1 // pred_check
      _
    $region15: #{tpu_custom_call.1} parent=1 // pred_check_branch
      %27 = sbr.rel (0) target = $region17
    $region16: #{tpu_custom_call.1} parent=1 // pred_region
      %28 = dma.done [#allocation3], 384
    $region17: #{tpu_custom_call.1} parent=1 // pred_fallthru
      _
    %v29 = vld [vmem:[%s0] sm:$0xff]
    %v30 = vld [vmem:[%s1] sm:$0xff]
    %vm31 = vcmp.ne.s32.totalorder %v30, 0
    %v32 = vsel %vm31, 16, %v29
    %v33 = vlaneseq
    %v34 = vand.u32 %v33, 127
    %35 = vset.pattern.permute.xlu0 0
    %36 = vperm.xlu0 %35, %v32
    %v37 = vpop.permute.xlu0 %36
    %vm38 = vcmp.eq.s32.totalorder %v37, %v34
    %v39 = vsel %vm38, 1, 0
    %v40 = vcvt.s32.f32 %v39
    %v41 = vld [vmem:[#allocation2] sm:$0xff]
    %v42 = vld [vmem:[#allocation2 + $0x8] sm:$0xff]
    %v43 = vld [vmem:[#allocation2 + $0x10] sm:$0x1]
    %vm44 = vcmask 138240
    %v46 = vsel %vm44, %v40, 0
    %vm48 = vcmask 1040384
    %v50 = vsel %vm48, %v43, 0
    %52 = vmatprep.subr.mxu0 0.0
    %53 = vmatpush1.msra.mxu0 0.0
    %54 = vmatprep.subr.mxu0 0.0
    %55 = vmatpush1.msra.mxu0 0.0
    %56 = vmatprep.subr.mxu0 0.0
    %57 = vmatpush1.msra.mxu0 0.0
    %58 = vmatprep.subr.mxu0 0.0
    %59 = vmatpush1.msra.mxu0 0.0
    %60 = vmatprep.subr.mxu0 0.0
    %61 = vmatpush1.msra.mxu0 0.0
    %62 = vmatprep.subr.mxu0 0.0
    %63 = vmatpush1.msra.mxu0 0.0
    %64 = vmatprep.subr.mxu0 0.0
    %65 = vmatpush1.msra.mxu0 0.0
    %66 = vmatprep.subr.mxu0 0.0
    %67 = vmatpush1.msra.mxu0 0.0
    %68 = vmatprep.subr.mxu0 0.0
    %69 = vmatpush1.msra.mxu0 0.0
    %70 = vmatprep.subr.mxu0 0.0
    %71 = vmatpush1.msra.mxu0 0.0
    %72 = vmatprep.subr.mxu0 0.0
    %73 = vmatpush1.msra.mxu0 0.0
    %74 = vmatprep.subr.mxu0 0.0
    %75 = vmatpush1.msra.mxu0 0.0
    %76 = vmatprep.subr.mxu0 0.0
    %77 = vmatpush1.msra.mxu0 0.0
    %78 = vmatprep.subr.mxu0 0.0
    %79 = vmatpush1.msra.mxu0 %v50
    %80 = vmatprep.subr.mxu0 0.0
    %81 = vmatpush1.msra.mxu0 %v42
    %82 = vmatprep.subr.mxu0 0.0
    %83 = vmatpush1.msra.mxu0 %v41
    %84 = vmatprep.subr.mxu0 0.0
    %85 = vmatpush2.msra.mxu0 0.0
    %86 = vmatprep.subr.mxu0 0.0
    %87 = vmatpush2.msra.mxu0 0.0
    %88 = vmatprep.subr.mxu0 0.0
    %89 = vmatpush2.msra.mxu0 0.0
    %90 = vmatprep.subr.mxu0 0.0
    %91 = vmatpush2.msra.mxu0 0.0
    %92 = vmatprep.subr.mxu0 0.0
    %93 = vmatpush2.msra.mxu0 0.0
    %94 = vmatprep.subr.mxu0 0.0
    %95 = vmatpush2.msra.mxu0 0.0
    %96 = vmatprep.subr.mxu0 0.0
    %97 = vmatpush2.msra.mxu0 0.0
    %98 = vmatprep.subr.mxu0 0.0
    %99 = vmatpush2.msra.mxu0 0.0
    %100 = vmatprep.subr.mxu0 0.0
    %101 = vmatpush2.msra.mxu0 0.0
    %102 = vmatprep.subr.mxu0 0.0
    %103 = vmatpush2.msra.mxu0 0.0
    %104 = vmatprep.subr.mxu0 0.0
    %105 = vmatpush2.msra.mxu0 0.0
    %106 = vmatprep.subr.mxu0 0.0
    %107 = vmatpush2.msra.mxu0 0.0
    %108 = vmatprep.subr.mxu0 0.0
    %109 = vmatpush2.msra.mxu0 0.0
    %110 = vmatprep.subr.mxu0 0.0
    %111 = vmatpush2.msra.mxu0 0.0
    %112 = vmatprep.subr.mxu0 0.0
    %113 = vmatpush2.msra.mxu0 0.0
    %114 = vmatprep.subr.mxu0 0.0
    %115 = vmatpush2.msra.mxu0 0.0
    %116 = vmatprep.mubr.f32.mxu0 0.0
    %117 = vmatmul.mubr.f32.gmra.mxu0 %v46
    %v118 = vpop.f32.mrf.mxu0
    %v119 = vadd.f32 0.0, %v118
    %v120 = vpop.f32.mrf.mxu0
    %121 = vdwg.mxu0
    %122 = vst [vmem:[#allocation5] sm:$0xff] %v119
    // Predicated region
    $region18: #{tpu_custom_call.1} parent=1 // pred_check
      _
    $region19: #{tpu_custom_call.1} parent=1 // pred_check_branch
      %124 = sbr.rel (0) target = $region21
    $region20: #{tpu_custom_call.1} parent=1 // pred_region
      %s126 = ssub.s32 128, 128
      %127 = vsyncadd [#allocation4], %s126
      %s129 = sshll.u32 [#allocation5], 4
      %s130 = int_to_ptr.vmem [resolvable:$true] %s129
      %132 = dma.vmem_to_hbm [thread:$0]  %s130, 128, %s3, [#allocation4]
    $region21: #{tpu_custom_call.1} parent=1 // pred_fallthru
      _
    // Predicated region
    $region22: #{tpu_custom_call.1} parent=1 // pred_check
      _
    $region23: #{tpu_custom_call.1} parent=1 // pred_check_branch
      %134 = sbr.rel (0) target = $region25
    $region24: #{tpu_custom_call.1} parent=1 // pred_region
      %135 = dma.done [#allocation4], 128
    $region25: #{tpu_custom_call.1} parent=1 // pred_fallthru
      _
    %136 = vsyncpa [#allocation3], 1
    %137 = vsyncpa [#allocation4], 1

</llo_original>
